<compile_context>
chip_gen: v7x
topology: tpu7x:2x2x1
jax: 0.10.0
libtpu: 0.0.40
codegen_flags: <defaults>
</compile_context>

<pallas_src>
import functools

import jax
import jax.numpy as jnp
from jax import lax
from jax.experimental import pallas as pl
from jax.experimental.pallas import tpu as pltpu

LANES = 128
SUBLANES = 8
_MAX_TILE_ROWS = 32768          # raised per perf review (only bounds code size)


def _round_up(x, m):
    return -(-x // m) * m


@functools.lru_cache(maxsize=None)
def _chip_config():
    """Per-generation tiling/VMEM knobs.

    v5e / v6e: single TensorCore -> one partial sum.
    v7x: two TensorCores -> 2 partial sums on a CORE_PARALLEL leading axis.
    """
    kind = ""
    try:
        devs = jax.devices()
        if devs:
            kind = devs[0].device_kind.lower()
    except Exception:
        pass
    if "v7" in kind or "7x" in kind:
        return {"num_partials": 2, "budget": 20 << 20,
                "vmem_limit": 48 << 20, "core_parallel": True}
    if "v6" in kind:
        return {"num_partials": 1, "budget": 22 << 20,
                "vmem_limit": 64 << 20, "core_parallel": False}
    if "v5 lite" in kind or "v5e" in kind or "v5lite" in kind:
        return {"num_partials": 1, "budget": 10 << 20,
                "vmem_limit": 28 << 20, "core_parallel": False}
    # Unknown chip: conservative defaults.
    return {"num_partials": 1, "budget": 10 << 20,
            "vmem_limit": None, "core_parallel": False}


def _make_mse_kernel(n_preds, tile_rows, rows, tiles_per_core, needs_mask):
    """Accumulate sum((pred_j - label)^2) into resident (8,128) partials."""
    n_groups = tile_rows // SUBLANES

    def kernel(*refs):
        p_refs = refs[:n_preds]
        l_ref = refs[n_preds]
        o_ref = refs[n_preds + 1]          # (1, n_preds, 8, 128) resident block

        c = pl.program_id(0)               # partial-sum axis (v7x: per core)
        t = pl.program_id(1)               # row-tile ("arbitrary") axis

        @pl.when(t == 0)
        def _():
            o_ref[...] = jnp.zeros_like(o_ref)

        logical_tile = c * tiles_per_core + t

        def accumulate(use_mask):
            lbl = l_ref[...].astype(jnp.float32)
            if use_mask:
                # Only ever traced for the boundary / overhang tile(s).
                n_valid = rows - logical_tile * tile_rows
                row_idx = lax.broadcasted_iota(jnp.int32, (tile_rows, LANES), 0)
                mask = row_idx < n_valid
            for j in range(n_preds):
                d = p_refs[j][...].astype(jnp.float32) - lbl
                sq = d * d
                if use_mask:
                    sq = jnp.where(mask, sq, 0.0)
                # Reduce over the leading (group) axis: pure VALU vreg adds,
                # no per-step cross-sublane XLU reduce.
                part = jnp.sum(sq.reshape(n_groups, SUBLANES, LANES), axis=0)
                o_ref[0, j, :, :] = o_ref[0, j, :, :] + part

        if needs_mask:
            is_edge = (logical_tile + 1) * tile_rows > rows

            @pl.when(jnp.logical_not(is_edge))
            def _():
                accumulate(False)          # steady-state: no mask ops at all

            @pl.when(is_edge)
            def _():
                accumulate(True)           # boundary (or overhang) tile only
        else:
            accumulate(False)

    return kernel


def _mse_partial_sums(p2d, l2d, rows, max_tile_rows=None, force_num_partials=None):
    """Pallas reduction over (rows,128) slabs -> per-pred sum of squared diffs."""
    n_preds = len(p2d)
    cfg = _chip_config()

    # Biggest row tile that keeps double-buffered inputs inside the budget.
    bytes_per_row = LANES * (sum(p.dtype.itemsize for p in p2d) + l2d.dtype.itemsize)
    tile_rows = cfg["budget"] // (2 * bytes_per_row)
    tile_rows = int(max(SUBLANES, min(_MAX_TILE_ROWS, tile_rows)))
    if max_tile_rows is not None:
        tile_rows = min(tile_rows, int(max_tile_rows))
    tile_rows = max(SUBLANES, (tile_rows // SUBLANES) * SUBLANES)
    tile_rows = min(tile_rows, _round_up(rows, SUBLANES))

    n_blocks = -(-rows // tile_rows)

    if force_num_partials is not None:
        num_partials = max(1, int(force_num_partials))
    else:
        num_partials = min(cfg["num_partials"], n_blocks)
        if num_partials > 1 and n_blocks % num_partials != 0:
            # Avoid fully-masked overhang tiles (pure wasted HBM traffic).
            num_partials = 1

    tiles_per_core = -(-n_blocks // num_partials)
    has_overhang = num_partials * tiles_per_core > n_blocks
    needs_mask = (num_partials * tiles_per_core * tile_rows) != rows

    def in_map(c, t):
        idx = c * tiles_per_core + t
        if has_overhang:
            # Overhang logical tiles (fully masked in the kernel) must never
            # trigger an out-of-bounds DMA.
            idx = jnp.minimum(idx, n_blocks - 1)
        return (idx, 0)

    in_spec = pl.BlockSpec((tile_rows, LANES), in_map)
    out_spec = pl.BlockSpec((1, n_preds, SUBLANES, LANES), lambda c, t: (c, 0, 0, 0))

    kernel = _make_mse_kernel(n_preds, tile_rows, rows, tiles_per_core, needs_mask)

    in_bytes = sum(int(a.size) * a.dtype.itemsize for a in p2d)
    in_bytes += int(l2d.size) * l2d.dtype.itemsize
    cost = pl.CostEstimate(
        flops=3 * n_preds * rows * LANES,
        transcendentals=0,
        bytes_accessed=in_bytes + num_partials * n_preds * SUBLANES * LANES * 4,
    )

    if num_partials > 1 and cfg["core_parallel"]:
        # Only CORE_PARALLEL actually shards the grid across v7x's two TCs.
        lead_sem = getattr(pltpu, "CORE_PARALLEL", "parallel")
    else:
        lead_sem = "arbitrary"

    partials = pl.pallas_call(
        kernel,
        out_shape=jax.ShapeDtypeStruct(
            (num_partials, n_preds, SUBLANES, LANES), jnp.float32),
        grid_spec=pltpu.PrefetchScalarGridSpec(
            num_scalar_prefetch=0,
            grid=(num_partials, tiles_per_core),
            in_specs=[in_spec] * (n_preds + 1),
            out_specs=out_spec,
        ),
        compiler_params=pltpu.CompilerParams(
            dimension_semantics=(lead_sem, "arbitrary"),
            vmem_limit_bytes=cfg["vmem_limit"],
        ),
        cost_estimate=cost,
    )(*p2d, l2d)

    # Single cheap cross-sublane + cross-lane reduce, once, in the wrapper.
    return jnp.sum(partials, axis=(0, 2, 3))      # (n_preds,)


def _check_squeeze_rule(pred_shape, label_shape):
    """Mirror the PyTorch module's squeeze(1) compatibility rule (shape only)."""
    p, l = list(pred_shape), list(label_shape)
    if len(p) == 4 and len(l) == 3 and p[1] == 1:
        p = [p[0]] + p[2:]
    elif len(p) == 3 and len(l) == 4 and l[1] == 1:
        l = [l[0]] + l[2:]
    if tuple(p) != tuple(l):
        raise ValueError(
            f"pred shape {pred_shape} is incompatible with labels {label_shape}")


def _sq_diff_sum_jnp(p_flat, l_flat):
    d = p_flat.astype(jnp.float32) - l_flat.astype(jnp.float32)
    return jnp.sum(d * d)


@functools.partial(
    jax.jit, static_argnames=("weights", "max_tile_rows", "force_num_partials"))
def _mse_loss_fused(preds, labels, weights, max_tile_rows=None,
                    force_num_partials=None):
    """sum_j weights[j] * mean((preds[j] - labels)^2) in one fused Pallas pass."""
    for p in preds:
        _check_squeeze_rule(p.shape, labels.shape)

    n_elems = int(labels.size)        # squeeze(1) never changes element count
    full_rows = n_elems // LANES
    main = full_rows * LANES

    flat_l = labels.reshape(-1)
    flat_ps = [p.reshape(-1) for p in preds]

    if full_rows >= SUBLANES:
        # Hot path: no pad copy.  The (rows,128) slab keeps the native dtype;
        # the f32 cast happens inside the kernel.
        l2d = flat_l[:main].reshape(full_rows, LANES)
        p2d = [fp[:main].reshape(full_rows, LANES) for fp in flat_ps]
        sq_sums = _mse_partial_sums(p2d, l2d, full_rows,
                                    max_tile_rows=max_tile_rows,
                                    force_num_partials=force_num_partials)
        if main < n_elems:
            # Ragged tail: < 128 elements -> trivial jnp reduction, no pad.
            tail_l = flat_l[main:]
            tail = jnp.stack([_sq_diff_sum_jnp(fp[main:], tail_l)
                              for fp in flat_ps])
            sq_sums = sq_sums + tail
    else:
        # Tiny inputs (< 8 full lane-rows): kernel overhead is pointless.
        sq_sums = jnp.stack([_sq_diff_sum_jnp(fp, flat_l) for fp in flat_ps])

    inv_n = 1.0 / float(n_elems)
    total = jnp.float32(0.0)
    for j, w in enumerate(weights):
        total = total + jnp.float32(w * inv_n) * sq_sums[j]
    return total


class MSELossPallas:
    """Pallas-TPU mirror of the PyTorch MSELoss module (reduction='mean')."""

    def __init__(self, weight=None, aux_weights=(1.0, 0.4, 0.4)):
        self.weight = weight                      # unused by the reference forward
        self.aux_weights = tuple(float(w) for w in aux_weights)

    @staticmethod
    def _dedupe(preds, weights):
        # Identical prediction tensors are DMA'd once with their weights
        # summed -- direct HBM-bandwidth win on this mem-bound kernel.
        order, acc = [], {}
        for p, w in zip(preds, weights):
            key = id(p)
            if key in acc:
                acc[key][1] += float(w)
            else:
                acc[key] = [p, float(w)]
                order.append(key)
        ps = tuple(acc[k][0] for k in order)
        ws = tuple(acc[k][1] for k in order)
        return ps, ws

    def __call__(self, preds, labels):
        if isinstance(preds, tuple):
            k = min(len(preds), len(self.aux_weights))
            ps, ws = self._dedupe(preds[:k], self.aux_weights[:k])
            return _mse_loss_fused(ps, labels, ws)
        return _mse_loss_fused((preds,), labels, (1.0,))


if __name__ == "__main__":
    key = jax.random.PRNGKey(0)
    k1, k2, k3, k4, k5, k6, k7, k8 = jax.random.split(key, 8)

    loss_fn = MSELossPallas()

    # Case 1: plain 4-D preds / 4-D labels (NCHW), n_elems % 128 == 0
    preds = jax.random.normal(k1, (2, 4, 16, 16), dtype=jnp.float32)
    labels = jax.random.normal(k2, (2, 4, 16, 16), dtype=jnp.float32)
    out1 = loss_fn(preds, labels)
    ref1 = jnp.mean((preds - labels) ** 2)

    # Case 2: preds (N,1,H,W) vs labels (N,H,W) -> squeeze(1) path
    preds2 = jax.random.normal(k3, (2, 1, 32, 32), dtype=jnp.float32)
    labels2 = jax.random.normal(k4, (2, 32, 32), dtype=jnp.float32)
    out2 = loss_fn(preds2, labels2)
    ref2 = jnp.mean((jnp.squeeze(preds2, 1) - labels2) ** 2)

    # Case 3: tuple of aux predictions; pred[0] repeated -> dedup folds weights,
    # and all unique preds are fused into ONE kernel pass over the labels.
    preds3b = jax.random.normal(k5, (2, 1, 32, 32), dtype=jnp.float32)
    out3 = loss_fn((preds2, preds3b, preds2), labels2)
    ref3 = (1.0 * ref2
            + 0.4 * jnp.mean((jnp.squeeze(preds3b, 1) - labels2) ** 2)
            + 0.4 * ref2)

    # Case 4: ragged n_elems (kernel on the 128-aligned prefix + jnp tail)
    preds4 = jax.random.normal(k6, (2, 9, 75), dtype=jnp.float32)
    labels4 = jax.random.normal(k7, (2, 9, 75), dtype=jnp.float32)
    out4 = loss_fn(preds4, labels4)
    ref4 = jnp.mean((preds4 - labels4) ** 2)

    # Case 5: bf16 inputs stay bf16 into the kernel (f32 cast happens in-kernel)
    preds5 = preds.astype(jnp.bfloat16)
    labels5 = labels.astype(jnp.bfloat16)
    out5 = loss_fn(preds5, labels5)
    ref5 = jnp.mean((preds5.astype(jnp.float32) - labels5.astype(jnp.float32)) ** 2)

    # Case 6: force the multi-tile / dual-partial / clamped + masked-tail path
    # (rows=20, tile_rows=8 -> 3 real blocks, 4 logical tiles, last one fully
    # masked; boundary tile partially masked).
    preds6 = jax.random.normal(k8, (2, 4, 16, 20), dtype=jnp.float32)
    labels6 = jax.random.normal(k2, (2, 4, 16, 20), dtype=jnp.float32)
    out6 = _mse_loss_fused((preds6,), labels6, (1.0,),
                           max_tile_rows=8, force_num_partials=2)
    ref6 = jnp.mean((preds6 - labels6) ** 2)

    # Case 7: tiny tensor (< 8 lane-rows) -> plain-jnp fallback path
    preds7 = jax.random.normal(k6, (2, 5, 5), dtype=jnp.float32)
    labels7 = jax.random.normal(k7, (2, 5, 5), dtype=jnp.float32)
    out7 = loss_fn(preds7, labels7)
    ref7 = jnp.mean((preds7 - labels7) ** 2)

    jax.block_until_ready((out1, out2, out3, out4, out5, out6, out7))

    assert jnp.allclose(out1, ref1, rtol=1e-5, atol=1e-6), (out1, ref1)
    assert jnp.allclose(out2, ref2, rtol=1e-5, atol=1e-6), (out2, ref2)
    assert jnp.allclose(out3, ref3, rtol=1e-5, atol=1e-6), (out3, ref3)
    assert jnp.allclose(out4, ref4, rtol=1e-5, atol=1e-6), (out4, ref4)
    assert jnp.allclose(out5, ref5, rtol=1e-4, atol=1e-5), (out5, ref5)
    assert jnp.allclose(out6, ref6, rtol=1e-5, atol=1e-6), (out6, ref6)
    assert jnp.allclose(out7, ref7, rtol=1e-5, atol=1e-6), (out7, ref7)

    print("KERNEL_OK")
</pallas_src>

<mosaic_0001>
module attributes {stable_mosaic.version = 11 : i64} {
  func.func @kernel(%arg0: i32, %arg1: i32, %arg2: memref<16x128xf32, #tpu.memory_space<vmem>>, %arg3: memref<16x128xf32, #tpu.memory_space<vmem>>, %arg4: memref<1x1x8x128xf32, #tpu.memory_space<vmem>>) attributes {dimension_semantics = [#tpu.dimension_semantics<arbitrary>, #tpu.dimension_semantics<arbitrary>], iteration_bounds = array<i64: 1, 1>, scalar_prefetch = 0 : i64, scratch_operands = 0 : i64, tpu.core_type = #tpu.core_type<tc>, window_params = [{transform_indices = @transform_0, window_bounds = array<i64: 16, 128>}, {transform_indices = @transform_1, window_bounds = array<i64: 16, 128>}, {transform_indices = @transform_2, window_bounds = array<i64: 1, 1, 8, 128>}]} {
    %c0_i32 = arith.constant 0 : i32
    %0 = arith.cmpi eq, %arg1, %c0_i32 : i32
    %1 = arith.extui %0 : i1 to i32
    %c0_i32_0 = arith.constant 0 : i32
    %2 = arith.cmpi ne, %1, %c0_i32_0 : i32
    scf.if %2 {
      %cst_12 = arith.constant 0.000000e+00 : f32
      %15 = vector.broadcast %cst_12 : f32 to vector<1x1x8x128xf32>
      %c0_13 = arith.constant 0 : index
      %c0_14 = arith.constant 0 : index
      %c0_15 = arith.constant 0 : index
      %c0_16 = arith.constant 0 : index
      %16 = vector.load %arg4[%c0_13, %c0_14, %c0_15, %c0_16] : memref<1x1x8x128xf32, #tpu.memory_space<vmem>>, vector<1x1x8x128xf32>
      tpu.vector_store %arg4[%c0_13, %c0_14, %c0_15, %c0_16], %15 {strides = array<i32>} : memref<1x1x8x128xf32, #tpu.memory_space<vmem>>, vector<1x1x8x128xf32>,
    } else {
    }
    %c0 = arith.constant 0 : index
    %c0_1 = arith.constant 0 : index
    %3 = vector.load %arg3[%c0, %c0_1] : memref<16x128xf32, #tpu.memory_space<vmem>>, vector<16x128xf32>
    %c0_2 = arith.constant 0 : index
    %c0_3 = arith.constant 0 : index
    %4 = vector.load %arg2[%c0_2, %c0_3] : memref<16x128xf32, #tpu.memory_space<vmem>>, vector<16x128xf32>
    %5 = arith.subf %4, %3 : vector<16x128xf32>
    %6 = arith.mulf %5, %5 : vector<16x128xf32>
    %7 = vector.shape_cast %6 : vector<16x128xf32> to vector<2x8x128xf32>
    %cst = arith.constant dense<0.000000e+00> : vector<8x128xf32>
    %8 = vector.multi_reduction <add>, %7, %cst [0] : vector<2x8x128xf32> to vector<8x128xf32>
    %c0_4 = arith.constant 0 : index
    %c0_5 = arith.constant 0 : index
    %c0_6 = arith.constant 0 : index
    %c0_7 = arith.constant 0 : index
    %9 = vector.load %arg4[%c0_4, %c0_5, %c0_6, %c0_7] : memref<1x1x8x128xf32, #tpu.memory_space<vmem>>, vector<1x1x8x128xf32>
    %10 = vector.shape_cast %9 : vector<1x1x8x128xf32> to vector<8x128xf32>
    %11 = arith.addf %10, %8 : vector<8x128xf32>
    %c0_8 = arith.constant 0 : index
    %c0_9 = arith.constant 0 : index
    %c0_10 = arith.constant 0 : index
    %c0_11 = arith.constant 0 : index
    %12 = vector.load %arg4[%c0_8, %c0_9, %c0_10, %c0_11] : memref<1x1x8x128xf32, #tpu.memory_space<vmem>>, vector<1x1x8x128xf32>
    %13 = vector.shape_cast %12 : vector<1x1x8x128xf32> to vector<8x128xf32>
    %14 = vector.shape_cast %11 : vector<8x128xf32> to vector<1x1x8x128xf32>
    tpu.vector_store %arg4[%c0_8, %c0_9, %c0_10, %c0_11], %14 {strides = array<i32>} : memref<1x1x8x128xf32, #tpu.memory_space<vmem>>, vector<1x1x8x128xf32>,
    return
  }
  func.func @transform_0(%arg0: i32, %arg1: i32) -> (i32, i32) {
    %c1_i32 = arith.constant 1 : i32
    %0 = arith.muli %arg0, %c1_i32 : i32
    %1 = arith.addi %0, %arg1 : i32
    %c0_i32 = arith.constant 0 : i32
    %c0_i32_0 = arith.constant 0 : i32
    return %1, %c0_i32 : i32, i32
  }
  func.func @transform_1(%arg0: i32, %arg1: i32) -> (i32, i32) {
    %c1_i32 = arith.constant 1 : i32
    %0 = arith.muli %arg0, %c1_i32 : i32
    %1 = arith.addi %0, %arg1 : i32
    %c0_i32 = arith.constant 0 : i32
    %c0_i32_0 = arith.constant 0 : i32
    return %1, %c0_i32 : i32, i32
  }
  func.func @transform_2(%arg0: i32, %arg1: i32) -> (i32, i32, i32, i32) {
    %c0_i32 = arith.constant 0 : i32
    %c0_i32_0 = arith.constant 0 : i32
    %c0_i32_1 = arith.constant 0 : i32
    %c0_i32_2 = arith.constant 0 : i32
    return %arg0, %c0_i32, %c0_i32_0, %c0_i32_1 : i32, i32, i32, i32
  }
}

</mosaic_0001>

<llo_original>
// kernel: _mse_loss_fused.1
$region0: #{_mse_loss_fused.1}
  #allocation0 [shape = 'u32[]', space=smem, size = 0x4, offset = 0x4, fixed_abs, tag = 'smem constant byte address 0x4 - core index']
  #allocation1 [shape = 'u32[144,128]{1,0:T(1,128)}', space=vmem, size = 0x12000, scoped, tag = 'internal scratch']
  %s0 = inlined_call_operand.vmem [shape: f32[16,128], index: 0, kind: input, shape index: {}]
  %s1 = inlined_call_operand.vmem [shape: f32[16,128], index: 1, kind: input, shape index: {}]
  %s2 = inlined_call_operand.vmem [shape: f32[1,1,8,128], index: 2, kind: output, shape index: {}]
  %s3 = sld [smem:[#allocation0]]
  $region22: #{_mse_loss_fused.1} parent=0
    _
  %s5 = ssub.s32 1, %s3
  %s6 = scalar_select 0, %s5, %s3
  // Predicated region
  $region2: #{_mse_loss_fused.1} parent=0 // pred_check
    _
  $region3: #{_mse_loss_fused.1} parent=0 // pred_check_branch
    %8 = sbr.rel (0) target = $region5
  $region4: #{_mse_loss_fused.1} parent=0 // pred_region
    %s9 = sadd.s32 0, 0
    %s10 = smul.u32 2, %s9
    %p11 = scmp.lt.s32.totalorder %s10, 1
    %s12 = scalar_select %p11, %s10, 1
    %s13 = smul.addr %s12, 8
    %s14 = scalar_lea.vmem %s0, %s13
    %s15 = sadd.s32 0, 0
    %s16 = smul.u32 2, %s15
  $region5: #{_mse_loss_fused.1} parent=0 // pred_fallthru
    _
  // Predicated region
  $region6: #{_mse_loss_fused.1} parent=0 // pred_check
    _
  $region7: #{_mse_loss_fused.1} parent=0 // pred_check_branch
    %18 = sbr.rel (0) target = $region9
  $region8: #{_mse_loss_fused.1} parent=0 // pred_region
    %s19 = sadd.s32 0, 0
    %s20 = smul.u32 2, %s19
    %p21 = scmp.lt.s32.totalorder %s20, 1
    %s22 = scalar_select %p21, %s20, 1
    %s23 = smul.addr %s22, 8
    %s24 = scalar_lea.vmem %s1, %s23
    %s25 = sadd.s32 0, 0
    %s26 = smul.u32 2, %s25
  $region9: #{_mse_loss_fused.1} parent=0 // pred_fallthru
    _
  %s27 = sadd.s32 0, 0
  %s28 = smul.u32 2, %s27
  %p29 = scmp.lt.s32.totalorder %s28, 1
  %s30 = scalar_select %p29, %s28, 1
  %s31 = smul.addr %s30, 8
  %s32 = scalar_lea.vmem %s0, %s31
  %s33 = sadd.s32 0, 0
  %s34 = smul.u32 2, %s33
  %p35 = scmp.lt.s32.totalorder %s34, 1
  %s36 = scalar_select %p35, %s34, 1
  %s37 = smul.addr %s36, 8
  %s38 = scalar_lea.vmem %s1, %s37
  %s39 = sadd.s32 0, 0
  %s40 = smul.u32 2, %s39
  %p41 = scmp.lt.s32.totalorder %s40, 1
  %s42 = scalar_select %p41, %s40, 1
  %s43 = smul.addr %s42, 8
  %s44 = scalar_lea.vmem %s0, %s43
  %s45 = sadd.s32 0, 0
  %s46 = smul.u32 2, %s45
  %s47 = sadd.s32 0, 0
  %s48 = smul.u32 2, %s47
  %p49 = scmp.lt.s32.totalorder %s48, 1
  %s50 = scalar_select %p49, %s48, 1
  %s51 = smul.addr %s50, 8
  %s52 = scalar_lea.vmem %s1, %s51
  %s53 = sadd.s32 0, 0
  %s54 = smul.u32 2, %s53
  %p55 = scmp.eq.s32.totalorder 0, 0
  // Predicated region
  $region10: #{_mse_loss_fused.1} parent=0 // pred_check
    %p56 = pneg %p55
  $region11: #{_mse_loss_fused.1} parent=0 // pred_check_branch
    %58 = sbr.rel (%p56) target = $region13
  $region12: #{_mse_loss_fused.1} parent=0 // pred_region
    %59 = vst [vmem:[%s2] sm:$0xff] 0.0
  $region13: #{_mse_loss_fused.1} parent=0 // pred_fallthru
    _
  %v60 = vld [vmem:[%s52] sm:$0xff]
  %v61 = vld [vmem:[%s52 + $0x8] sm:$0xff]
  %v62 = vld [vmem:[%s44] sm:$0xff]
  %v63 = vld [vmem:[%s44 + $0x8] sm:$0xff]
  %v64 = vsub.f32 %v62, %v60
  %v65 = vsub.f32 %v63, %v61
  %v66 = vmul.f32 %v64, %v64
  %v67 = vmul.f32 %v65, %v65
  %v68 = vadd.f32 %v66, %v67
  %v69 = vld [vmem:[%s2] sm:$0xff]
  %v70 = vadd.f32 %v69, %v68
  %71 = vst [vmem:[%s2] sm:$0xff] %v70
  // Predicated region
  $region14: #{_mse_loss_fused.1} parent=0 // pred_check
    _
  $region15: #{_mse_loss_fused.1} parent=0 // pred_check_branch
    %73 = sbr.rel (0) target = $region17
  $region16: #{_mse_loss_fused.1} parent=0 // pred_region
    _
  $region17: #{_mse_loss_fused.1} parent=0 // pred_fallthru
    _
  // Predicated region
  $region18: #{_mse_loss_fused.1} parent=0 // pred_check
    _
  $region19: #{_mse_loss_fused.1} parent=0 // pred_check_branch
    %75 = sbr.rel (0) target = $region21
  $region20: #{_mse_loss_fused.1} parent=0 // pred_region
    _
  $region21: #{_mse_loss_fused.1} parent=0 // pred_fallthru
    _

</llo_original>
